<compile_context>
chip_gen: v7x
topology: tpu7x:2x2x1
jax: 0.10.0
libtpu: 0.0.40
codegen_flags: <defaults>
</compile_context>

<pallas_src>
import functools

import jax
import jax.numpy as jnp
from jax import lax
from jax.experimental import pallas as pl
from jax.experimental.pallas import tpu as pltpu


def _temporal_block_kernel(x_ref, halo_ref, w_ref, b_ref, o_ref, *,
                           kernel_size, dilation, padding, tile_l, halo_w):
    # x_ref:    (1, C_in, TILE_L)   current time tile, NCL layout (time on lanes)
    # halo_ref: (1, C_in, HALO_W)   previous tile's last HALO_W input columns (HBM re-read)
    # w_ref:    (K, C_out, C_in)    weight-normed conv weight, tap-major
    # b_ref:    (C_out, 1)          bias (f32)
    # o_ref:    (1, C_out, TILE_L)  chomped + ReLU'd output tile (lane-dense)
    j = pl.program_id(1)

    x_tile = x_ref[0]                                        # (C_in, TILE_L)
    # Causal left padding: at the first time tile the halo must be zeros.  Inputs are
    # finite activations, so mask-by-multiply (cheap VPU scalar broadcast) is safe.
    halo = halo_ref[0] * (j > 0).astype(x_tile.dtype)        # (C_in, HALO_W)

    # Lane-aligned window build: halo_w is a multiple of 128 whenever the time axis is
    # tiled, so both pieces land at lane-aligned offsets (plain stores, no relayout).
    xw = jnp.concatenate([halo, x_tile], axis=1)             # (C_in, HALO_W + TILE_L)

    # K accumulated dots; the weight slice w_ref[k] is a static leading-axis index
    # (free), only the lane-shifted rhs view remains per tap.
    acc = None
    for k in range(kernel_size):
        start = halo_w - padding + k * dilation
        rhs = xw[:, start:start + tile_l]                    # (C_in, TILE_L)
        d = jnp.dot(w_ref[k], rhs, preferred_element_type=jnp.float32)
        acc = d if acc is None else acc + d
    acc = acc + b_ref[...]                                   # bias, f32
    o_ref[0] = jnp.maximum(acc, 0.0).astype(o_ref.dtype)     # ReLU (dropout = identity)


def _vmem_budget_bytes():
    try:
        cap = pltpu.get_tpu_info().vmem_capacity_bytes
    except Exception:
        cap = 64 * 1024 * 1024            # conservative default (v7x per-core VMEM)
    return int(cap * 3 // 5)              # 60% of physical; headroom for compiler scratch


def _pick_time_tile(L, c_in, c_out, kernel_size, x_bytes, halo_unit, vmem_avail,
                    max_tile_override=None):
    """Largest multiple-of-halo_unit tile that divides L and fits the VMEM budget."""
    # Per-time-column VMEM: double-buffered input block + window copy + up to K live
    # shifted tap views (x dtype) + double-buffered f32 output block + f32 accumulator.
    per_col = (3 + kernel_size) * c_in * x_bytes + 3 * c_out * 4
    max_cols = max(vmem_avail // per_col, halo_unit)
    if max_tile_override is not None:
        max_cols = min(max_cols, max_tile_override)
    best, t = 0, halo_unit
    limit = min(L, max_cols)
    while t <= limit:
        if L % t == 0:
            best = t
        t += halo_unit
    if best == 0:
        # Fall back to a single tile over the whole time axis.
        # TODO(synk): cdiv grid + masked tail tile for huge non-divisible L.
        best = L
    return best


def _weight_norm(weight_v, weight_g):
    """weight_norm: w = g * v / ||v||, norm over (in_channels, kernel) per out channel."""
    v32 = weight_v.astype(jnp.float32)
    v_norm = jnp.sqrt(jnp.sum(v32 * v32, axis=(1, 2), keepdims=True))
    return weight_g.reshape(-1, 1, 1).astype(jnp.float32) * v32 / v_norm   # (C_out, C_in, K)


def temporal_block_forward(x, weight_v, weight_g, bias, *, stride, dilation, padding,
                           compute_dtype=jnp.bfloat16, max_tile_override=None):
    """x: (N, C_in, L) float32, PyTorch NCL layout. Returns (N, C_out, L) float32."""
    N, C_in, L = x.shape
    C_out, _, K = weight_v.shape
    assert stride == 1, "TCN TemporalBlock uses stride=1"
    # The model always builds causal blocks: padding == dilation*(K-1), so L_out == L.
    assert padding == dilation * (K - 1) and padding >= 1, "expect causal TCN config"
    assert padding <= L

    w = _weight_norm(weight_v, weight_g)                                   # (C_out, C_in, K)
    w_kmajor = jnp.transpose(w, (2, 0, 1)).astype(compute_dtype)           # (K, C_out, C_in)
    b2 = bias.reshape(C_out, 1).astype(jnp.float32)
    x_c = x.astype(compute_dtype)   # bf16 operands, f32 accumulation in-kernel

    x_bytes = jnp.dtype(compute_dtype).itemsize
    halo_unit = ((padding + 127) // 128) * 128                             # lane-aligned halo
    budget = _vmem_budget_bytes()
    fixed = (2 * K * C_out * C_in * x_bytes          # weight (assume double-buffered)
             + 2 * C_in * halo_unit * x_bytes        # halo blocks
             + 8 * C_out)                            # bias
    avail = max(budget - fixed, 8 * 1024 * 1024)
    tile_l = _pick_time_tile(L, C_in, C_out, K, x_bytes, halo_unit, avail,
                             max_tile_override)
    assert L % tile_l == 0
    num_tiles = L // tile_l
    halo_w = halo_unit if L >= halo_unit else L      # full-dim block for tiny L
    assert padding <= halo_w
    if num_tiles > 1:
        assert halo_w <= tile_l and tile_l % halo_w == 0
    hbpt = max(tile_l // halo_w, 1)                  # halo blocks per time tile

    kernel = functools.partial(
        _temporal_block_kernel,
        kernel_size=K, dilation=dilation, padding=padding, tile_l=tile_l, halo_w=halo_w)

    flops = 2 * N * C_out * K * C_in * L
    bytes_accessed = (N * C_in * L * x_bytes                       # x tiles
                      + N * num_tiles * C_in * halo_w * x_bytes    # halo re-reads
                      + N * C_out * L * 4                          # f32 output
                      + K * C_out * C_in * x_bytes + C_out * 4)    # weight + bias

    out = pl.pallas_call(
        kernel,
        out_shape=jax.ShapeDtypeStruct((N, C_out, L), jnp.float32),
        grid=(N, num_tiles),
        in_specs=[
            pl.BlockSpec((1, C_in, tile_l), lambda n, j: (n, 0, j)),
            # Previous tile's trailing halo columns, re-read from HBM (C_in*halo_w*2 B
            # per tile — noise vs the tile itself).  No cross-iteration carry, so the
            # time axis can be "parallel".  Clamped to block 0 at j == 0 and zeroed
            # inside the kernel (causal left padding).
            pl.BlockSpec((1, C_in, halo_w),
                         lambda n, j: (n, 0, jnp.maximum(j * hbpt - 1, 0))),
            # Constant index maps => DMA'd once per core (block index never changes).
            pl.BlockSpec((K, C_out, C_in), lambda n, j: (0, 0, 0)),
            pl.BlockSpec((C_out, 1), lambda n, j: (0, 0)),
        ],
        out_specs=pl.BlockSpec((1, C_out, tile_l), lambda n, j: (n, 0, j)),
        compiler_params=pltpu.CompilerParams(
            dimension_semantics=("parallel", "parallel"),
            vmem_limit_bytes=int(budget)),
        cost_estimate=pl.CostEstimate(flops=int(flops), transcendentals=0,
                                      bytes_accessed=int(bytes_accessed)),
    )(x_c, x_c, w_kmajor, b2)
    return out


def _reference(x, weight_v, weight_g, bias, *, dilation, padding, compute_dtype):
    """Pure-JAX reference: same bf16 operand rounding as the kernel, f32 math."""
    w = _weight_norm(weight_v, weight_g)
    xr = x.astype(compute_dtype).astype(jnp.float32)
    wr = w.astype(compute_dtype).astype(jnp.float32)
    y = lax.conv_general_dilated(
        xr, wr, window_strides=(1,), padding=[(padding, padding)],
        rhs_dilation=(dilation,), dimension_numbers=("NCH", "OIH", "NCH"),
        precision=lax.Precision.HIGHEST) + bias[None, :, None].astype(jnp.float32)
    y = y[:, :, :-padding]          # Chomp1d
    return jnp.maximum(y, 0.0)      # ReLU (dropout identity)


if __name__ == "__main__":
    def run_case(name, N, C_in, C_out, L, K, dilation, case_id, max_tile_override=None):
        padding = (K - 1) * dilation
        key = jax.random.fold_in(jax.random.PRNGKey(0), case_id)
        kx, kv, kb = jax.random.split(key, 3)
        x = jax.random.normal(kx, (N, C_in, L), jnp.float32)
        # conv1.weight ~ N(0, 0.01); weight_norm init sets g = ||v|| (so effective w == v)
        weight_v = 0.01 * jax.random.normal(kv, (C_out, C_in, K), jnp.float32)
        weight_g = jnp.sqrt(jnp.sum(weight_v ** 2, axis=(1, 2)))
        bias = 0.01 * jax.random.normal(kb, (C_out,), jnp.float32)

        out = temporal_block_forward(
            x, weight_v, weight_g, bias, stride=1, dilation=dilation, padding=padding,
            max_tile_override=max_tile_override)
        out = jax.block_until_ready(out)

        ref = _reference(x, weight_v, weight_g, bias, dilation=dilation, padding=padding,
                         compute_dtype=jnp.bfloat16)
        assert out.shape == (N, C_out, L), (name, out.shape)
        err = float(jnp.max(jnp.abs(out - ref)))
        assert jnp.allclose(out, ref, atol=5e-5, rtol=2e-3), (name, err)

    # TemporalBlock(1024, 1024, 3, 1, 1, 2) shrunk: budget-driven picker => single time
    # tile per batch element (fewer grid steps for the small-C, overhead-bound regime).
    run_case("tb3_single_tile", N=2, C_in=8, C_out=16, L=256, K=3, dilation=1, case_id=0)
    # Same block with forced time tiling so the 128-aligned HBM halo re-read is exercised.
    run_case("tb3_tiled", N=2, C_in=8, C_out=16, L=256, K=3, dilation=1, case_id=1,
             max_tile_override=128)
    # TemporalBlock(1024, 512, 7, 1, 2, 12) shrunk: 7 taps, dilation=2, padding=12, tiled.
    run_case("tb7_tiled", N=1, C_in=8, C_out=8, L=384, K=7, dilation=2, case_id=2,
             max_tile_override=128)

    print("KERNEL_OK")
</pallas_src>

<mosaic_0001>
module attributes {stable_mosaic.version = 11 : i64} {
  func.func @_temporal_block_kernel(%arg0: i32, %arg1: i32, %arg2: memref<1x8x256xbf16, #tpu.memory_space<vmem>>, %arg3: memref<1x8x128xbf16, #tpu.memory_space<vmem>>, %arg4: memref<3x16x8xbf16, #tpu.memory_space<vmem>>, %arg5: memref<16x1xf32, #tpu.memory_space<vmem>>, %arg6: memref<1x16x256xf32, #tpu.memory_space<vmem>>) attributes {dimension_semantics = [#tpu.dimension_semantics<parallel>, #tpu.dimension_semantics<parallel>], iteration_bounds = array<i64: 2, 1>, scalar_prefetch = 0 : i64, scratch_operands = 0 : i64, tpu.core_type = #tpu.core_type<tc>, window_params = [{transform_indices = @transform_0, window_bounds = array<i64: 1, 8, 256>}, {transform_indices = @transform_1, window_bounds = array<i64: 1, 8, 128>}, {pipeline_mode = #tpu.pipeline_mode<synchronous>, transform_indices = @transform_2, window_bounds = array<i64: 3, 16, 8>}, {pipeline_mode = #tpu.pipeline_mode<synchronous>, transform_indices = @transform_3, window_bounds = array<i64: 16, 1>}, {transform_indices = @transform_4, window_bounds = array<i64: 1, 16, 256>}]} {
    %c0 = arith.constant 0 : index
    %c0_0 = arith.constant 0 : index
    %c0_1 = arith.constant 0 : index
    %0 = vector.load %arg2[%c0, %c0_0, %c0_1] : memref<1x8x256xbf16, #tpu.memory_space<vmem>>, vector<1x8x256xbf16>
    %1 = vector.shape_cast %0 : vector<1x8x256xbf16> to vector<8x256xbf16>
    %c0_2 = arith.constant 0 : index
    %c0_3 = arith.constant 0 : index
    %c0_4 = arith.constant 0 : index
    %2 = vector.load %arg3[%c0_2, %c0_3, %c0_4] : memref<1x8x128xbf16, #tpu.memory_space<vmem>>, vector<1x8x128xbf16>
    %3 = vector.shape_cast %2 : vector<1x8x128xbf16> to vector<8x128xbf16>
    %c0_i32 = arith.constant 0 : i32
    %4 = arith.cmpi sgt, %arg1, %c0_i32 : i32
    %5 = arith.extui %4 : i1 to i32
    %6 = arith.sitofp %5 : i32 to f32
    %7 = arith.truncf %6 : f32 to bf16
    %8 = vector.broadcast %7 : bf16 to vector<8x128xbf16>
    %9 = arith.mulf %3, %8 : vector<8x128xbf16>
    %10 = tpu.concatenate %9, %1 in 1 : vector<8x128xbf16>, vector<8x256xbf16> -> vector<8x384xbf16>
    %11 = vector.extract_strided_slice %10 {offsets = [0, 126], sizes = [8, 256], strides = [1, 1]} : vector<8x384xbf16> to vector<8x256xbf16>
    %c0_5 = arith.constant 0 : index
    %c0_6 = arith.constant 0 : index
    %c0_7 = arith.constant 0 : index
    %12 = vector.load %arg4[%c0_5, %c0_6, %c0_7] : memref<3x16x8xbf16, #tpu.memory_space<vmem>>, vector<1x16x8xbf16>
    %13 = vector.shape_cast %12 : vector<1x16x8xbf16> to vector<16x8xbf16>
    %cst = arith.constant dense<0.000000e+00> : vector<16x256xf32>
    %14 = tpu.matmul %13, %11, %cst {dimension_numbers = #tpu.dot_dimension_numbers<[1], [0], [0], [1], [0, 0, 1, 1], [], []>} : vector<16x8xbf16>, vector<8x256xbf16>, vector<16x256xf32> -> vector<16x256xf32>
    %15 = vector.extract_strided_slice %10 {offsets = [0, 127], sizes = [8, 256], strides = [1, 1]} : vector<8x384xbf16> to vector<8x256xbf16>
    %c1 = arith.constant 1 : index
    %c0_8 = arith.constant 0 : index
    %c0_9 = arith.constant 0 : index
    %16 = vector.load %arg4[%c1, %c0_8, %c0_9] : memref<3x16x8xbf16, #tpu.memory_space<vmem>>, vector<1x16x8xbf16>
    %17 = vector.shape_cast %16 : vector<1x16x8xbf16> to vector<16x8xbf16>
    %cst_10 = arith.constant dense<0.000000e+00> : vector<16x256xf32>
    %18 = tpu.matmul %17, %15, %cst_10 {dimension_numbers = #tpu.dot_dimension_numbers<[1], [0], [0], [1], [0, 0, 1, 1], [], []>} : vector<16x8xbf16>, vector<8x256xbf16>, vector<16x256xf32> -> vector<16x256xf32>
    %19 = arith.addf %14, %18 : vector<16x256xf32>
    %20 = vector.extract_strided_slice %10 {offsets = [0, 128], sizes = [8, 256], strides = [1, 1]} : vector<8x384xbf16> to vector<8x256xbf16>
    %c2 = arith.constant 2 : index
    %c0_11 = arith.constant 0 : index
    %c0_12 = arith.constant 0 : index
    %21 = vector.load %arg4[%c2, %c0_11, %c0_12] : memref<3x16x8xbf16, #tpu.memory_space<vmem>>, vector<1x16x8xbf16>
    %22 = vector.shape_cast %21 : vector<1x16x8xbf16> to vector<16x8xbf16>
    %cst_13 = arith.constant dense<0.000000e+00> : vector<16x256xf32>
    %23 = tpu.matmul %22, %20, %cst_13 {dimension_numbers = #tpu.dot_dimension_numbers<[1], [0], [0], [1], [0, 0, 1, 1], [], []>} : vector<16x8xbf16>, vector<8x256xbf16>, vector<16x256xf32> -> vector<16x256xf32>
    %24 = arith.addf %19, %23 : vector<16x256xf32>
    %c0_14 = arith.constant 0 : index
    %c0_15 = arith.constant 0 : index
    %25 = vector.load %arg5[%c0_14, %c0_15] : memref<16x1xf32, #tpu.memory_space<vmem>>, vector<16x1xf32>
    %26 = vector.broadcast %25 : vector<16x1xf32> to vector<16x256xf32>
    %27 = arith.addf %24, %26 : vector<16x256xf32>
    %cst_16 = arith.constant 0.000000e+00 : f32
    %28 = vector.broadcast %cst_16 : f32 to vector<16x256xf32>
    %29 = arith.maximumf %27, %28 : vector<16x256xf32>
    %c0_17 = arith.constant 0 : index
    %c0_18 = arith.constant 0 : index
    %c0_19 = arith.constant 0 : index
    %30 = vector.load %arg6[%c0_17, %c0_18, %c0_19] : memref<1x16x256xf32, #tpu.memory_space<vmem>>, vector<1x16x256xf32>
    %31 = vector.shape_cast %30 : vector<1x16x256xf32> to vector<16x256xf32>
    %32 = vector.shape_cast %29 : vector<16x256xf32> to vector<1x16x256xf32>
    tpu.vector_store %arg6[%c0_17, %c0_18, %c0_19], %32 {strides = array<i32>} : memref<1x16x256xf32, #tpu.memory_space<vmem>>, vector<1x16x256xf32>,
    return
  }
  func.func @transform_0(%arg0: i32, %arg1: i32) -> (i32, i32, i32) {
    %c0_i32 = arith.constant 0 : i32
    %c0_i32_0 = arith.constant 0 : i32
    return %arg0, %c0_i32, %arg1 : i32, i32, i32
  }
  func.func @transform_1(%arg0: i32, %arg1: i32) -> (i32, i32, i32) {
    %c2_i32 = arith.constant 2 : i32
    %0 = arith.muli %arg1, %c2_i32 : i32
    %c1_i32 = arith.constant 1 : i32
    %1 = arith.subi %0, %c1_i32 : i32
    %c0_i32 = arith.constant 0 : i32
    %2 = arith.maxsi %1, %c0_i32 : i32
    %c0_i32_0 = arith.constant 0 : i32
    %c0_i32_1 = arith.constant 0 : i32
    return %arg0, %c0_i32_0, %2 : i32, i32, i32
  }
  func.func @transform_2(%arg0: i32, %arg1: i32) -> (i32, i32, i32) {
    %c0_i32 = arith.constant 0 : i32
    %c0_i32_0 = arith.constant 0 : i32
    %c0_i32_1 = arith.constant 0 : i32
    %c0_i32_2 = arith.constant 0 : i32
    return %c0_i32, %c0_i32_0, %c0_i32_1 : i32, i32, i32
  }
  func.func @transform_3(%arg0: i32, %arg1: i32) -> (i32, i32) {
    %c0_i32 = arith.constant 0 : i32
    %c0_i32_0 = arith.constant 0 : i32
    %c0_i32_1 = arith.constant 0 : i32
    return %c0_i32, %c0_i32_0 : i32, i32
  }
  func.func @transform_4(%arg0: i32, %arg1: i32) -> (i32, i32, i32) {
    %c0_i32 = arith.constant 0 : i32
    %c0_i32_0 = arith.constant 0 : i32
    return %arg0, %c0_i32, %arg1 : i32, i32, i32
  }
}

</mosaic_0001>

<llo_original>
// kernel: tpu_custom_call.1
$region0: #{tpu_custom_call.1}
  #allocation0 [shape = 'u32[]', space=smem, size = 0x4, offset = 0x4, fixed_abs, tag = 'smem constant byte address 0x4 - core index']
  #allocation1 [shape = 'u32[144,128]{1,0:T(1,128)}', space=vmem, size = 0x12000, scoped, tag = 'internal scratch']
  %s0 = inlined_call_operand.vmem [shape: bf16[2,8,256], index: 0, kind: input, shape index: {}]
  %s1 = inlined_call_operand.vmem [shape: bf16[2,8,256], index: 1, kind: input, shape index: {}]
  %s2 = inlined_call_operand.vmem [shape: bf16[3,16,8], index: 2, kind: input, shape index: {}]
  %s3 = inlined_call_operand.vmem [shape: f32[16,1], index: 3, kind: input, shape index: {}]
  %s4 = inlined_call_operand.hbm [shape: f32[2,16,256], index: 4, kind: output, shape index: {}]
  %s5 = sld [smem:[#allocation0]]
  $region49: #{tpu_custom_call.1} parent=0
    _
  %s7 = ssub.s32 1, %s5
  %s8 = scalar_select 0, %s7, %s5
  $region1: #{tpu_custom_call.1} parent=0
    #allocation2 [shape = 'u8[32768]{0}', space=vmem, size = 0x8000, scoped, tag = 'output window, operand 0']
    #allocation3 [shape = 's32[2]{0}', space=sflag, size = 0x8, scoped, tag = 'scoped memory for tpu_custom_call.1']
    %9 = vsyncpa [#allocation3], 0
    %s10 = scalar_lea.sflag [#allocation3], 1
    %11 = vsyncpa %s10, 0
    loop: start=0, step=1, limit=4
    $region2: #{tpu_custom_call.1} parent=1 // loop_pre_header
      _
    $region3: #{tpu_custom_call.1} parent=1 // loop_header
      %s13 = sphi 0, %s17
      %p14 = scmp.ge.s32.totalorder %s13, 4
      %s20 = sphi 0, %s32
      %s21 = sphi 0, %s28
      %s22 = sphi 0, %s20
      %s23 = sphi 0, %s21
      %s24 = sphi 0, %s22
      %s25 = sphi 0, %s23
      %s37 = sphi 0, %s39
      %s40 = sphi 0, %s37
      %s41 = sphi 0, %s40
      %s57 = sphi 0, %s41
      %s73 = sphi 0, %s75
      %s76 = sphi 0, %s73
      %s77 = sphi 0, %s76
      %s93 = sphi 0, %s77
      %s97 = sphi 0, %s97
      %s99 = sphi 0, %s97
      %s100 = sphi 0, %s99
      %s114 = sphi 0, %s100
      %s118 = sphi 0, %s118
      %s120 = sphi 0, %s118
      %s121 = sphi 0, %s120
      %s135 = sphi 0, %s121
      %s143 = sphi 0, %s145
      %s146 = sphi 0, %s143
      %s147 = sphi 0, %s146
      %s163 = sphi 0, %s147
    $region4: #{tpu_custom_call.1} parent=1 // loop_header_branch
      %16 = sbr.rel (%p14) target = $region8
    $region5: #{tpu_custom_call.1} parent=1 // loop_body
      %s18 = ssub.s32 %s13, 1
      %s19 = ssub.s32 %s13, 2
      %s26 = sadd.s32 1, %s21
      %p27 = scmp.ge.s32.totalorder %s26, 1
      %s28 = scalar_select %p27, 0, %s26
      %s29 = sadd.s32 1, %s20
      %s30 = scalar_select %p27, %s29, %s20
      %p31 = scmp.ge.s32.totalorder %s30, 2
      %s32 = scalar_select %p31, 0, %s30
      %s33 = ssub.s32 %s20, %s32
      %s34 = ssub.s32 %s21, %s28
      %s35 = sor.u32 %s33, %s34
      %p36 = scmp.eq.s32.totalorder %s35, 0
      %s38 = sadd.s32 %s37, 1
      %s39 = scalar_select %p36, %s37, %s38
      %p42 = pneg %p36
      %p43 = scmp.eq.s32.totalorder %s13, 1
      %p44 = por %p42, %p43
      %p45 = scmp.ne.s32.totalorder %s37, %s40
      %p46 = scmp.eq.s32.totalorder %s13, 0
      %p47 = por %p45, %p46
      %p48 = scmp.ne.s32.totalorder %s37, %s40
      %p49 = scmp.eq.s32.totalorder %s18, 1
      %p50 = por %p48, %p49
      %p51 = scmp.ne.s32.totalorder %s40, %s41
      %p52 = scmp.eq.s32.totalorder %s18, 0
      %p53 = por %p51, %p52
      %p54 = scmp.ne.s32.totalorder %s40, %s41
      %p55 = scmp.eq.s32.totalorder %s19, 1
      %p56 = por %p54, %p55
      %p58 = scmp.ne.s32.totalorder %s41, %s57
      %p59 = scmp.eq.s32.totalorder %s19, 0
      %p60 = por %p58, %p59
      %s61 = smul.u32 %s21, 2
      %s62 = ssub.s32 %s61, 1
      %p63 = scmp.gt.s32.totalorder %s62, 0
      %s64 = scalar_select %p63, %s62, 0
      %s65 = smul.u32 %s28, 2
      %s66 = ssub.s32 %s65, 1
      %p67 = scmp.gt.s32.totalorder %s66, 0
      %s68 = scalar_select %p67, %s66, 0
      %s69 = ssub.s32 %s20, %s32
      %s70 = ssub.s32 %s64, %s68
      %s71 = sor.u32 %s69, %s70
      %p72 = scmp.eq.s32.totalorder %s71, 0
      %s74 = sadd.s32 %s73, 1
      %s75 = scalar_select %p72, %s73, %s74
      %p78 = pneg %p72
      %p79 = scmp.eq.s32.totalorder %s13, 1
      %p80 = por %p78, %p79
      %p81 = scmp.ne.s32.totalorder %s73, %s76
      %p82 = scmp.eq.s32.totalorder %s13, 0
      %p83 = por %p81, %p82
      %p84 = scmp.ne.s32.totalorder %s73, %s76
      %p85 = scmp.eq.s32.totalorder %s18, 1
      %p86 = por %p84, %p85
      %p87 = scmp.ne.s32.totalorder %s76, %s77
      %p88 = scmp.eq.s32.totalorder %s18, 0
      %p89 = por %p87, %p88
      %p90 = scmp.ne.s32.totalorder %s76, %s77
      %p91 = scmp.eq.s32.totalorder %s19, 1
      %p92 = por %p90, %p91
      %p94 = scmp.ne.s32.totalorder %s77, %s93
      %p95 = scmp.eq.s32.totalorder %s19, 0
      %p96 = por %p94, %p95
      %s98 = sadd.s32 %s97, 1
      %p101 = scmp.eq.s32.totalorder %s13, 1
      %p102 = scmp.ne.s32.totalorder %s97, %s99
      %p103 = scmp.eq.s32.totalorder %s13, 0
      %p104 = por %p102, %p103
      %p105 = scmp.ne.s32.totalorder %s97, %s99
      %p106 = scmp.eq.s32.totalorder %s18, 1
      %p107 = por %p105, %p106
      %p108 = scmp.ne.s32.totalorder %s99, %s100
      %p109 = scmp.eq.s32.totalorder %s18, 0
      %p110 = por %p108, %p109
      %p111 = scmp.ne.s32.totalorder %s99, %s100
      %p112 = scmp.eq.s32.totalorder %s19, 1
      %p113 = por %p111, %p112
      %p115 = scmp.ne.s32.totalorder %s100, %s114
      %p116 = scmp.eq.s32.totalorder %s19, 0
      %p117 = por %p115, %p116
      %s119 = sadd.s32 %s118, 1
      %p122 = scmp.eq.s32.totalorder %s13, 1
      %p123 = scmp.ne.s32.totalorder %s118, %s120
      %p124 = scmp.eq.s32.totalorder %s13, 0
      %p125 = por %p123, %p124
      %p126 = scmp.ne.s32.totalorder %s118, %s120
      %p127 = scmp.eq.s32.totalorder %s18, 1
      %p128 = por %p126, %p127
      %p129 = scmp.ne.s32.totalorder %s120, %s121
      %p130 = scmp.eq.s32.totalorder %s18, 0
      %p131 = por %p129, %p130
      %p132 = scmp.ne.s32.totalorder %s120, %s121
      %p133 = scmp.eq.s32.totalorder %s19, 1
      %p134 = por %p132, %p133
      %p136 = scmp.ne.s32.totalorder %s121, %s135
      %p137 = scmp.eq.s32.totalorder %s19, 0
      %p138 = por %p136, %p137
      %s139 = ssub.s32 %s20, %s32
      %s140 = ssub.s32 %s21, %s28
      %s141 = sor.u32 %s139, %s140
      %p142 = scmp.eq.s32.totalorder %s141, 0
      %s144 = sadd.s32 %s143, 1
      %s145 = scalar_select %p142, %s143, %s144
      %p148 = pneg %p142
      %p149 = scmp.eq.s32.totalorder %s13, 1
      %p150 = por %p148, %p149
      %p151 = scmp.ne.s32.totalorder %s143, %s146
      %p152 = scmp.eq.s32.totalorder %s13, 0
      %p153 = por %p151, %p152
      %p154 = scmp.ne.s32.totalorder %s143, %s146
      %p155 = scmp.eq.s32.totalorder %s18, 1
      %p156 = por %p154, %p155
      %p157 = scmp.ne.s32.totalorder %s146, %s147
      %p158 = scmp.eq.s32.totalorder %s18, 0
      %p159 = por %p157, %p158
      %p160 = scmp.ne.s32.totalorder %s146, %s147
      %p161 = scmp.eq.s32.totalorder %s19, 1
      %p162 = por %p160, %p161
      %p164 = scmp.ne.s32.totalorder %s147, %s163
      %p165 = scmp.eq.s32.totalorder %s19, 0
      %p166 = por %p164, %p165
      %p167 = scmp.le.s32.totalorder 1, %s13
      %p168 = scmp.lt.s32.totalorder %s13, 3
      %p169 = pnand %p167, %p168
      %p170 = pneg %p169
      // Predicated region
      $region9: #{tpu_custom_call.1} parent=5 // pred_check
        _
      $region10: #{tpu_custom_call.1} parent=5 // pred_check_branch
        %172 = sbr.rel (%p169) target = $region12
      $region11: #{tpu_custom_call.1} parent=5 // pred_region
        %s173 = ssub.s32 %s13, 1
        // Predicated region
        $region13: #{tpu_custom_call.1} parent=11 // pred_check
          %p174 = pneg %p110
        $region14: #{tpu_custom_call.1} parent=11 // pred_check_branch
          %176 = sbr.rel (%p174) target = $region16
        $region15: #{tpu_custom_call.1} parent=11 // pred_region
          _
        $region16: #{tpu_custom_call.1} parent=11 // pred_fallthru
          _
        // Predicated region
        $region17: #{tpu_custom_call.1} parent=11 // pred_check
          %p177 = pneg %p131
        $region18: #{tpu_custom_call.1} parent=11 // pred_check_branch
          %179 = sbr.rel (%p177) target = $region20
        $region19: #{tpu_custom_call.1} parent=11 // pred_region
          _
        $region20: #{tpu_custom_call.1} parent=11 // pred_fallthru
          _
      $region12: #{tpu_custom_call.1} parent=5 // pred_fallthru
        _
      %p180 = scmp.lt.s32.totalorder %s13, 2
      // Predicated region
      $region21: #{tpu_custom_call.1} parent=5 // pred_check
        %p181 = pneg %p180
      $region22: #{tpu_custom_call.1} parent=5 // pred_check_branch
        %183 = sbr.rel (%p181) target = $region24
      $region23: #{tpu_custom_call.1} parent=5 // pred_region
        // Predicated region
        $region25: #{tpu_custom_call.1} parent=23 // pred_check
          %p184 = pneg %p47
        $region26: #{tpu_custom_call.1} parent=23 // pred_check_branch
          %186 = sbr.rel (%p184) target = $region28
        $region27: #{tpu_custom_call.1} parent=23 // pred_region
          %s187 = smul.u32 2, %s21
          %p188 = scmp.lt.s32.totalorder %s20, 1
          %s189 = scalar_select %p188, %s20, 1
          %p190 = scmp.lt.s32.totalorder %s187, 1
          %s191 = scalar_select %p190, %s187, 1
          %s192 = smul.addr %s189, 2
          %s193 = sadd.s32 %s191, %s192
          %s194 = smul.addr %s193, 4
          %s195 = scalar_lea.vmem %s0, %s194
          %s196 = smul.u32 2, %s21
        $region28: #{tpu_custom_call.1} parent=23 // pred_fallthru
          _
        // Predicated region
        $region29: #{tpu_custom_call.1} parent=23 // pred_check
          %p197 = pneg %p83
        $region30: #{tpu_custom_call.1} parent=23 // pred_check_branch
          %199 = sbr.rel (%p197) target = $region32
        $region31: #{tpu_custom_call.1} parent=23 // pred_region
          %s200 = smul.u32 %s21, 2
          %s201 = ssub.s32 %s200, 1
          %p202 = scmp.gt.s32.totalorder %s201, 0
          %s203 = scalar_select %p202, %s201, 0
          %p204 = scmp.lt.s32.totalorder %s20, 1
          %s205 = scalar_select %p204, %s20, 1
          %p206 = scmp.lt.s32.totalorder %s203, 1
          %s207 = scalar_select %p206, %s203, 1
          %s208 = smul.addr %s205, 2
          %s209 = sadd.s32 %s207, %s208
          %s210 = smul.addr %s209, 4
          %s211 = scalar_lea.vmem %s1, %s210
          %s212 = smul.u32 %s21, 2
          %s213 = ssub.s32 %s212, 1
          %p214 = scmp.gt.s32.totalorder %s213, 0
          %s215 = scalar_select %p214, %s213, 0
        $region32: #{tpu_custom_call.1} parent=23 // pred_fallthru
          _
      $region24: #{tpu_custom_call.1} parent=5 // pred_fallthru
        _
      %p216 = scmp.le.s32.totalorder 1, %s13
      %p217 = scmp.lt.s32.totalorder %s13, 3
      %p218 = pnand %p216, %p217
      %p219 = pneg %p218
      // Predicated region
      $region33: #{tpu_custom_call.1} parent=5 // pred_check
        _
      $region34: #{tpu_custom_call.1} parent=5 // pred_check_branch
        %221 = sbr.rel (%p218) target = $region36
      $region35: #{tpu_custom_call.1} parent=5 // pred_region
        %s222 = ssub.s32 %s13, 1
        %s223 = smul.u32 2, %s23
        %p224 = scmp.lt.s32.totalorder %s22, 1
        %s225 = scalar_select %p224, %s22, 1
        %p226 = scmp.lt.s32.totalorder %s223, 1
        %s227 = scalar_select %p226, %s223, 1
        %s228 = smul.addr %s225, 2
        %s229 = sadd.s32 %s227, %s228
        %s230 = smul.addr %s229, 4
        %s231 = scalar_lea.vmem %s0, %s230
        %p232 = pneg %p53
        %p233 = pneg %p50
        %s234 = smul.u32 %s23, 2
        %s235 = ssub.s32 %s234, 1
        %p236 = scmp.gt.s32.totalorder %s235, 0
        %s237 = scalar_select %p236, %s235, 0
        %p238 = scmp.lt.s32.totalorder %s22, 1
        %s239 = scalar_select %p238, %s22, 1
        %p240 = scmp.lt.s32.totalorder %s237, 1
        %s241 = scalar_select %p240, %s237, 1
        %s242 = smul.addr %s239, 2
        %s243 = sadd.s32 %s241, %s242
        %s244 = smul.addr %s243, 4
        %s245 = scalar_lea.vmem %s1, %s244
        %p246 = pneg %p89
        %p247 = pneg %p86
        %p248 = pneg %p110
        %p249 = pneg %p107
        %p250 = pneg %p131
        %p251 = pneg %p128
        %p252 = pneg %p159
        %p253 = pneg %p156
        %s254 = sand.u32 %s146, 1
        %s255 = scalar_lea.sflag [#allocation3], %s254
        %s256 = sand.u32 %s146, 1
        %s257 = smul.addr %s256, 32
        %s258 = scalar_lea.vmem [#allocation2], %s257
        %s259 = smul.u32 2, %s23
        %p260 = scmp.lt.s32.totalorder %s22, 1
        %s261 = scalar_select %p260, %s22, 1
        %p262 = scmp.lt.s32.totalorder %s259, 1
        %s263 = scalar_select %p262, %s259, 1
        %s264 = smul.addr %s261, 2
        %s265 = sadd.s32 %s263, %s264
        %s266 = smul.addr %s265, 4
        %s267 = scalar_lea.vmem %s0, %s266
        %s268 = smul.u32 2, %s23
        %s269 = smul.u32 %s23, 2
        %s270 = ssub.s32 %s269, 1
        %p271 = scmp.gt.s32.totalorder %s270, 0
        %s272 = scalar_select %p271, %s270, 0
        %p273 = scmp.lt.s32.totalorder %s22, 1
        %s274 = scalar_select %p273, %s22, 1
        %p275 = scmp.lt.s32.totalorder %s272, 1
        %s276 = scalar_select %p275, %s272, 1
        %s277 = smul.addr %s274, 2
        %s278 = sadd.s32 %s276, %s277
        %s279 = smul.addr %s278, 4
        %s280 = scalar_lea.vmem %s1, %s279
        %s281 = smul.u32 %s23, 2
        %s282 = ssub.s32 %s281, 1
        %p283 = scmp.gt.s32.totalorder %s282, 0
        %s284 = scalar_select %p283, %s282, 0
        %s285 = smul.u32 2, %s23
        %v287 = vld [vmem:[%s267] sm:$0xff]
        %v288 = vld [vmem:[%s280] sm:$0xf]
        %p289 = scmp.gt.s32.totalorder %s23, 0
        %s290 = scalar_select %p289, 1, 0
        %s291 = scvt.s32.f32 %s290
        %p293 = scmp.ne.f32.partialorder %s291, %s291
        %s294 = sshrl.u32 %s291, 16
        %s295 = sand.u32 %s294, 1
        %s296 = sadd.s32 32767, %s295
        %s297 = sadd.s32 %s291, %s296
        %s298 = sand.u32 %s297, 4294901760
        %s299 = scalar_select %p293, 2143289344, %s298
        %s301 = sshrl.u32 %s299, 16
        %s302 = sshll.u32 %s301, 16
        %s303 = sor.u32 %s301, %s302
        %v304 = vstv %s303
        %v306 = vmul.bf16 %v288, %v304
        %v308 = vunpack.c.l.b16 %v287
        %v309 = vunpack.c.h.b16 %v287
        %v310 = vpack.c.b16 %v308, %v308
        %v311 = vpack.c.b16 %v309, %v309
        %v312 = vld [vmem:[%s2] sm:$0xf]
        %v313 = vld [vmem:[%s2 + $0x4] sm:$0xf]
        %s314 = scalar_lea.vmem %s2, 8
        %v315 = vld [vmem:[%s314] sm:$0xf]
        %v316 = vld [vmem:[%s314 + $0x4] sm:$0xf]
        %v319 = vunpack.c.l.b16 %v315
        %v320 = vunpack.c.l.b16 %v316
        %v321 = vpack.c.b16 %v320, %v319
        %323 = vrot.lane.b32.xlu0 %v306, 1
        %v324 = vpop.permute.xlu0 %323
        %325 = vrot.lane.b32.xlu0 %v310, 1
        %v326 = vpop.permute.xlu0 %325
        %327 = vrot.lane.b32.xlu0 %v311, 1
        %v328 = vpop.permute.xlu0 %327
        %vm329 = vcmask 7168
        %v330 = vsel %vm329, %v324, %v326
        %v331 = vsel %vm329, %v326, %v328
        %vm332 = vcmask 64512
        %v334 = vsel %vm332, %v321, 0
        %vm336 = vcmask 1043456
        %v338 = vsel %vm336, %v330, 0
        %v341 = vsel %vm336, %v331, 0
        %343 = vmatprep.subr.bf16.mxu0 %v341
        %344 = vmatpush1.bf16.msra.mxu0 %v338
        %345 = vmatprep.subr.bf16.mxu0 0
        %346 = vmatpush1.bf16.msra.mxu0 0
        %347 = vmatprep.subr.bf16.mxu0 0
        %348 = vmatpush1.bf16.msra.mxu0 0
        %349 = vmatprep.subr.bf16.mxu0 0
        %350 = vmatpush1.bf16.msra.mxu0 0
        %351 = vmatprep.subr.bf16.mxu0 0
        %352 = vmatpush1.bf16.msra.mxu0 0
        %353 = vmatprep.subr.bf16.mxu0 0
        %354 = vmatpush1.bf16.msra.mxu0 0
        %355 = vmatprep.subr.bf16.mxu0 0
        %356 = vmatpush1.bf16.msra.mxu0 0
        %357 = vmatprep.subr.bf16.mxu0 0
        %358 = vmatpush1.bf16.msra.mxu0 0
        %359 = vmatprep.subr.bf16.mxu0 0
        %360 = vmatpush1.bf16.msra.mxu0 0
        %361 = vmatprep.subr.bf16.mxu0 0
        %362 = vmatpush1.bf16.msra.mxu0 0
        %363 = vmatprep.subr.bf16.mxu0 0
        %364 = vmatpush1.bf16.msra.mxu0 0
        %365 = vmatprep.subr.bf16.mxu0 0
        %366 = vmatpush1.bf16.msra.mxu0 0
        %367 = vmatprep.subr.bf16.mxu0 0
        %368 = vmatpush1.bf16.msra.mxu0 0
        %369 = vmatprep.subr.bf16.mxu0 0
        %370 = vmatpush1.bf16.msra.mxu0 0
        %371 = vmatprep.subr.bf16.mxu0 0
        %372 = vmatpush1.bf16.msra.mxu0 0
        %373 = vmatprep.subr.bf16.mxu0 0
        %374 = vmatpush1.bf16.msra.mxu0 0
        %375 = vmatprep.mubr.bf16.mxu0 0
        %376 = vmatmul.mubr.bf16.gmra.mrb[0].mxu0 %v334
        %v377 = vpop.f32.mrb[0].mxu0
        %v378 = vadd.f32 0.0, %v377
        %v379 = vpop.f32.mrb[0].mxu0
        %v380 = vadd.f32 0.0, %v379
        %v381 = vpop.f32.mrb[0].mxu0
        %v382 = vadd.f32 0.0, %v381
        %v383 = vpop.f32.mrb[0].mxu0
        %v384 = vadd.f32 0.0, %v383
        %385 = vdwg.mxu0
        %v388 = vunpack.c.l.b16 %v312
        %v389 = vunpack.c.l.b16 %v313
        %v390 = vpack.c.b16 %v389, %v388
        %391 = vrot.lane.b32.xlu0 %v306, 2
        %v392 = vpop.permute.xlu0 %391
        %393 = vrot.lane.b32.xlu0 %v310, 2
        %v394 = vpop.permute.xlu0 %393
        %395 = vrot.lane.b32.xlu0 %v311, 2
        %v396 = vpop.permute.xlu0 %395
        %vm397 = vcmask 15360
        %v398 = vsel %vm397, %v392, %v394
        %v399 = vsel %vm397, %v394, %v396
        %v401 = vsel %vm332, %v390, 0
        %v404 = vsel %vm336, %v398, 0
        %v407 = vsel %vm336, %v399, 0
        %409 = vmatprep.subr.bf16.mxu0 %v407
        %410 = vmatpush1.bf16.msra.mxu0 %v404
        %411 = vmatprep.subr.bf16.mxu0 0
        %412 = vmatpush1.bf16.msra.mxu0 0
        %413 = vmatprep.subr.bf16.mxu0 0
        %414 = vmatpush1.bf16.msra.mxu0 0
        %415 = vmatprep.subr.bf16.mxu0 0
        %416 = vmatpush1.bf16.msra.mxu0 0
        %417 = vmatprep.subr.bf16.mxu0 0
        %418 = vmatpush1.bf16.msra.mxu0 0
        %419 = vmatprep.subr.bf16.mxu0 0
        %420 = vmatpush1.bf16.msra.mxu0 0
        %421 = vmatprep.subr.bf16.mxu0 0
        %422 = vmatpush1.bf16.msra.mxu0 0
        %423 = vmatprep.subr.bf16.mxu0 0
        %424 = vmatpush1.bf16.msra.mxu0 0
        %425 = vmatprep.subr.bf16.mxu0 0
        %426 = vmatpush1.bf16.msra.mxu0 0
        %427 = vmatprep.subr.bf16.mxu0 0
        %428 = vmatpush1.bf16.msra.mxu0 0
        %429 = vmatprep.subr.bf16.mxu0 0
        %430 = vmatpush1.bf16.msra.mxu0 0
        %431 = vmatprep.subr.bf16.mxu0 0
        %432 = vmatpush1.bf16.msra.mxu0 0
        %433 = vmatprep.subr.bf16.mxu0 0
        %434 = vmatpush1.bf16.msra.mxu0 0
        %435 = vmatprep.subr.bf16.mxu0 0
        %436 = vmatpush1.bf16.msra.mxu0 0
        %437 = vmatprep.subr.bf16.mxu0 0
        %438 = vmatpush1.bf16.msra.mxu0 0
        %439 = vmatprep.subr.bf16.mxu0 0
        %440 = vmatpush1.bf16.msra.mxu0 0
        %441 = vmatprep.mubr.bf16.mxu0 0
        %442 = vmatmul.mubr.bf16.gmra.mrb[0].mxu0 %v401
        %v443 = vpop.f32.mrb[0].mxu0
        %v444 = vadd.f32 %v378, %v443
        %v445 = vpop.f32.mrb[0].mxu0
        %v446 = vadd.f32 %v380, %v445
        %v447 = vpop.f32.mrb[0].mxu0
        %v448 = vadd.f32 %v382, %v447
        %v449 = vpop.f32.mrb[0].mxu0
        %v450 = vadd.f32 %v384, %v449
        %451 = vdwg.mxu0
        %s452 = scalar_lea.vmem %s2, 16
        %v453 = vld [vmem:[%s452] sm:$0xf]
        %v454 = vld [vmem:[%s452 + $0x4] sm:$0xf]
        %v457 = vunpack.c.l.b16 %v453
        %v458 = vunpack.c.l.b16 %v454
        %v459 = vpack.c.b16 %v458, %v457
        %v461 = vsel %vm332, %v459, 0
        %v464 = vsel %vm336, %v310, 0
        %v467 = vsel %vm336, %v311, 0
        %469 = vmatprep.subr.bf16.mxu0 %v467
        %470 = vmatpush1.bf16.msra.mxu0 %v464
        %471 = vmatprep.subr.bf16.mxu0 0
        %472 = vmatpush1.bf16.msra.mxu0 0
        %473 = vmatprep.subr.bf16.mxu0 0
        %474 = vmatpush1.bf16.msra.mxu0 0
        %475 = vmatprep.subr.bf16.mxu0 0
        %476 = vmatpush1.bf16.msra.mxu0 0
        %477 = vmatprep.subr.bf16.mxu0 0
        %478 = vmatpush1.bf16.msra.mxu0 0
        %479 = vmatprep.subr.bf16.mxu0 0
        %480 = vmatpush1.bf16.msra.mxu0 0
        %481 = vmatprep.subr.bf16.mxu0 0
        %482 = vmatpush1.bf16.msra.mxu0 0
        %483 = vmatprep.subr.bf16.mxu0 0
        %484 = vmatpush1.bf16.msra.mxu0 0
        %485 = vmatprep.subr.bf16.mxu0 0
        %486 = vmatpush1.bf16.msra.mxu0 0
        %487 = vmatprep.subr.bf16.mxu0 0
        %488 = vmatpush1.bf16.msra.mxu0 0
        %489 = vmatprep.subr.bf16.mxu0 0
        %490 = vmatpush1.bf16.msra.mxu0 0
        %491 = vmatprep.subr.bf16.mxu0 0
        %492 = vmatpush1.bf16.msra.mxu0 0
        %493 = vmatprep.subr.bf16.mxu0 0
        %494 = vmatpush1.bf16.msra.mxu0 0
        %495 = vmatprep.subr.bf16.mxu0 0
        %496 = vmatpush1.bf16.msra.mxu0 0
        %497 = vmatprep.subr.bf16.mxu0 0
        %498 = vmatpush1.bf16.msra.mxu0 0
        %499 = vmatprep.subr.bf16.mxu0 0
        %500 = vmatpush1.bf16.msra.mxu0 0
        %501 = vmatprep.mubr.bf16.mxu0 0
        %502 = vmatmul.mubr.bf16.gmra.mrb[0].mxu0 %v461
        %v503 = vpop.f32.mrb[0].mxu0
        %v504 = vadd.f32 0.0, %v503
        %v505 = vpop.f32.mrb[0].mxu0
        %v506 = vadd.f32 0.0, %v505
        %v507 = vpop.f32.mrb[0].mxu0
        %v508 = vadd.f32 0.0, %v507
        %v509 = vpop.f32.mrb[0].mxu0
        %v510 = vadd.f32 0.0, %v509
        %511 = vdwg.mxu0
        %v512 = vadd.f32 %v444, %v504
        %v513 = vadd.f32 %v446, %v506
        %v514 = vadd.f32 %v448, %v508
        %v515 = vadd.f32 %v450, %v510
        %v516 = vld [vmem:[%s3] sm:$0xff]
        %v517 = vld [vmem:[%s3 + $0x8] sm:$0xff]
        %519 = vset.pattern.permute.xlu0 0
        %520 = vperm.xlu0 %519, %v516
        %v521 = vpop.permute.xlu0 %520
        %524 = vset.pattern.permute.xlu0 0
        %525 = vperm.xlu0 %524, %v517
        %v526 = vpop.permute.xlu0 %525
        %v528 = vadd.f32 %v512, %v521
        %v529 = vadd.f32 %v513, %v521
        %v530 = vadd.f32 %v514, %v526
        %v531 = vadd.f32 %v515, %v526
        %v532 = vmax.f32 %v528, 0.0
        %v533 = vmax.f32 %v529, 0.0
        %v534 = vmax.f32 %v530, 0.0
        %v535 = vmax.f32 %v531, 0.0
        %536 = vst [vmem:[%s258] sm:$0xff] %v532
        %537 = vst [vmem:[%s258 + $0x8] sm:$0xff] %v533
        %538 = vst [vmem:[%s258 + $0x10] sm:$0xff] %v534
        %539 = vst [vmem:[%s258 + $0x18] sm:$0xff] %v535
        %s540 = sand.u32 %s146, 1
        %s541 = scalar_lea.sflag [#allocation3], %s540
        %s542 = sand.u32 %s146, 1
        %s543 = smul.addr %s542, 32
        %s544 = scalar_lea.vmem [#allocation2], %s543
        // Predicated region
        $region37: #{tpu_custom_call.1} parent=35 // pred_check
          %p545 = pneg %p156
        $region38: #{tpu_custom_call.1} parent=35 // pred_check_branch
          %547 = sbr.rel (%p545) target = $region40
        $region39: #{tpu_custom_call.1} parent=35 // pred_region
          %s548 = smul.u32 2, %s23
          %s550 = ssub.s32 512, 512
          %551 = vsyncadd %s541, %s550
          %s552 = smul.addr %s22, 4
          %s553 = sadd.s32 %s548, %s552
          %s554 = smul.addr %s553, 128
          %s555 = scalar_lea.hbm %s4, %s554
          %s556 = sshll.u32 %s544, 4
          %s557 = int_to_ptr.vmem [resolvable:$true] %s556
          %562 = dma.vmem_to_hbm [thread:$0]  %s557, 512, %s555, %s541, 256, 256, 16
        $region40: #{tpu_custom_call.1} parent=35 // pred_fallthru
          _
      $region36: #{tpu_custom_call.1} parent=5 // pred_fallthru
        _
      %p563 = scmp.le.s32.totalorder 2, %s13
      // Predicated region
      $region41: #{tpu_custom_call.1} parent=5 // pred_check
        %p564 = pneg %p563
      $region42: #{tpu_custom_call.1} parent=5 // pred_check_branch
        %566 = sbr.rel (%p564) target = $region44
      $region43: #{tpu_custom_call.1} parent=5 // pred_region
        %s567 = ssub.s32 %s13, 2
        // Predicated region
        $region45: #{tpu_custom_call.1} parent=43 // pred_check
          %p568 = pneg %p162
        $region46: #{tpu_custom_call.1} parent=43 // pred_check_branch
          %570 = sbr.rel (%p568) target = $region48
        $region47: #{tpu_custom_call.1} parent=43 // pred_region
          %s571 = sand.u32 %s147, 1
          %s572 = scalar_lea.sflag [#allocation3], %s571
          %s573 = sand.u32 %s147, 1
          %s574 = smul.addr %s573, 32
          %s575 = scalar_lea.vmem [#allocation2], %s574
          %576 = dma.done %s572, 512
        $region48: #{tpu_custom_call.1} parent=43 // pred_fallthru
          _
      $region44: #{tpu_custom_call.1} parent=5 // pred_fallthru
        _
    $region6: #{tpu_custom_call.1} parent=1 // loop_footer
      %s17 = sadd.s32 1, %s13
    $region7: #{tpu_custom_call.1} parent=1 // loop_footer_branch
      %12 = sbr.rel target = $region3
    $region8: #{tpu_custom_call.1} parent=1 // loop_exit
      _
    %577 = vsyncpa [#allocation3], 1
    %s578 = scalar_lea.sflag [#allocation3], 1
    %579 = vsyncpa %s578, 1

</llo_original>
